<compile_context>
chip_gen: v5e
topology: v5e:2x2
jax: 0.10.0
libtpu: 0.0.40
codegen_flags: <defaults>
</compile_context>

<pallas_src>
import jax
import jax.numpy as jnp
from jax.experimental import pallas as pl
from jax.experimental.pallas import tpu as pltpu


def _round_up(x, m):
    return ((x + m - 1) // m) * m


def _vmem_capacity_bytes():
    """Per-TensorCore VMEM capacity; falls back to 128 MiB (v5e/v6e) if the
    query is unavailable (e.g. interpret mode / older runtimes)."""
    try:
        return int(pltpu.get_tpu_info().vmem_capacity_bytes)
    except Exception:
        return 128 * 1024 * 1024


def mlp_kernel(x_ref, w1_ref, st1_ref, w2_ref, st2_ref, o_ref):
    # fc1: bf16 matmul on the MXU with f32 accumulation.
    h = jnp.dot(x_ref[...], w1_ref[...], preferred_element_type=jnp.float32)
    # Fused BN affine + ReLU + bf16 downcast on the VPU; producing the large
    # (tm, Hp) intermediate in bf16 halves vreg/spill traffic before fc2.
    h = jnp.maximum(h * st1_ref[0:1, :] + st1_ref[1:2, :], 0.0).astype(jnp.bfloat16)
    # fc2: bf16 matmul, f32 accumulation, fused BN affine + ReLU.
    y = jnp.dot(h, w2_ref[...], preferred_element_type=jnp.float32)
    y = jnp.maximum(y * st2_ref[0:1, :] + st2_ref[1:2, :], 0.0)
    o_ref[...] = y.astype(o_ref.dtype)  # bf16 store -> half the HBM writeback


def _choose_row_tile(M, Cp, Hp, Cop, vmem_budget, min_grid=2):
    """Largest row tile (multiple of 16, capped at 1024) that fits the VMEM
    budget, while keeping at least `min_grid` grid steps so both v7x
    TensorCores get work (harmless on single-TC v5e/v6e)."""
    # Grid-invariant weights / scale-shift tables are single-buffered
    # (pl.Buffered(1)) so they are counted once, not double-buffered.
    const_bytes = (Cp * Hp + Hp * Cop) * 2 + (2 * Hp + 2 * Cop) * 4
    avail = vmem_budget - const_bytes
    # Per row: double-buffered bf16 input tile, double-buffered bf16 output
    # tile, f32 (tm, Hp) matmul result, its bf16 copy, and a spill margin.
    per_row = 2 * Cp * 2 + 2 * Cop * 2 + Hp * 4 + Hp * 2 + Hp * 2
    if avail < per_row * 16:
        # TODO(synk): add a hidden-dim reduction grid axis (f32 VMEM accumulator
        # + pl.when init/finalize, axis "arbitrary") so very large H still fits
        # v7x's 64 MiB VMEM instead of failing here.
        raise ValueError(
            "Resident weights exceed the VMEM budget; hidden-dim tiling needed "
            f"(const_bytes={const_bytes}, budget={vmem_budget}).")
    tm = avail // per_row
    tm = max(16, min(1024, (tm // 16) * 16))
    tm = min(tm, _round_up(M, 16))
    # Keep >= min_grid row tiles so dimension_semantics=("parallel",) can
    # shard row tiles across both v7x TensorCores.
    if M > 16 * min_grid:
        tm = min(tm, max(16, _round_up(-(-M // min_grid), 16)))
    return int(tm)


def mlp_pallas(x, params, *, tm=None, out_dtype=jnp.bfloat16):
    """x: (T, B, N, C) float32.  Returns (T, B, N, C_out) in `out_dtype`."""
    T, B, N, C = x.shape
    w1t, s1, t1, w2t, s2, t2 = params
    H = w1t.shape[1]
    C_out = w2t.shape[1]
    M = T * B * N

    # Lane-pad every channel axis to a multiple of 128 (MXU depth / lane width).
    Cp = _round_up(C, 128)
    Hp = _round_up(H, 128)
    Cop = _round_up(C_out, 128)

    # Hardware-aware VMEM limit: ~48 MiB on v7x (64 MiB/TC), 64 MiB on v5e/v6e.
    vmem_cap = _vmem_capacity_bytes()
    vmem_limit = min(64 * 1024 * 1024, (vmem_cap * 3) // 4)
    vmem_budget = vmem_limit - 8 * 1024 * 1024   # headroom for compiler scratch

    if tm is None:
        tm = _choose_row_tile(M, Cp, Hp, Cop, vmem_budget)
    Mp = _round_up(M, tm)          # ragged last tile handled by zero-padding M

    # Single fused XLA pass per operand: reshape + f32->bf16 cast + pad.
    x2d = jnp.pad(x.reshape(M, C).astype(jnp.bfloat16),
                  ((0, Mp - M), (0, Cp - C)))
    w1p = jnp.pad(w1t.astype(jnp.bfloat16), ((0, Cp - C), (0, Hp - H)))
    w2p = jnp.pad(w2t.astype(jnp.bfloat16), ((0, Hp - H), (0, Cop - C_out)))
    # Stack scale & shift into one (2, K) array each -> fewer tiny DMAs.
    st1 = jnp.pad(jnp.stack([s1, t1]).astype(jnp.float32),
                  ((0, 0), (0, Hp - H)))
    st2 = jnp.pad(jnp.stack([s2, t2]).astype(jnp.float32),
                  ((0, 0), (0, Cop - C_out)))

    resident = pl.Buffered(1)      # grid-invariant operands: no double buffer

    out2d = pl.pallas_call(
        mlp_kernel,
        out_shape=jax.ShapeDtypeStruct((Mp, Cop), jnp.bfloat16),
        grid_spec=pltpu.PrefetchScalarGridSpec(
            num_scalar_prefetch=0,
            grid=(Mp // tm,),
            in_specs=[
                pl.BlockSpec((tm, Cp), lambda i: (i, 0)),    # x row tile
                pl.BlockSpec((Cp, Hp), lambda i: (0, 0),
                             pipeline_mode=resident),        # W1^T (resident)
                pl.BlockSpec((2, Hp), lambda i: (0, 0),
                             pipeline_mode=resident),        # BN1 [scale;shift]
                pl.BlockSpec((Hp, Cop), lambda i: (0, 0),
                             pipeline_mode=resident),        # W2^T (resident)
                pl.BlockSpec((2, Cop), lambda i: (0, 0),
                             pipeline_mode=resident),        # BN2 [scale;shift]
            ],
            out_specs=pl.BlockSpec((tm, Cop), lambda i: (i, 0)),
        ),
        compiler_params=pltpu.CompilerParams(
            dimension_semantics=("parallel",),     # shard row tiles across TCs
            vmem_limit_bytes=vmem_limit,
        ),
    )(x2d, w1p, st1, w2p, st2)

    # TODO(synk): when chaining several such layers, keep the padded bf16
    # [Mp, Cp] layout between calls to avoid this slice/reshape HBM pass.
    return out2d[:M, :C_out].astype(out_dtype).reshape(T, B, N, C_out)


def make_params(key, in_features, hidden_features, out_features, eps=1e-5):
    """Deterministic synthetic parameters; BN in inference mode folded to
    per-channel scale/shift: y = (x - mean)/sqrt(var+eps)*gamma + beta."""
    ks = jax.random.split(key, 10)

    # fc1_linear: torch weight (H, C), bias (H,)
    w1 = jax.random.normal(ks[0], (hidden_features, in_features), jnp.float32) * 0.1
    b1 = jax.random.normal(ks[1], (hidden_features,), jnp.float32) * 0.1
    # fc1_bn params / running stats
    g1 = 1.0 + 0.1 * jax.random.normal(ks[2], (hidden_features,), jnp.float32)
    be1 = 0.1 * jax.random.normal(ks[3], (hidden_features,), jnp.float32)
    mu1 = 0.1 * jax.random.normal(ks[4], (hidden_features,), jnp.float32)
    var1 = 0.5 + jnp.abs(jax.random.normal(ks[5], (hidden_features,), jnp.float32))

    # fc2_linear: torch weight (C_out, H), bias (C_out,)
    w2 = jax.random.normal(ks[6], (out_features, hidden_features), jnp.float32) * 0.1
    b2 = jax.random.normal(ks[7], (out_features,), jnp.float32) * 0.1
    # fc2_bn
    g2 = 1.0 + 0.1 * jax.random.normal(ks[8], (out_features,), jnp.float32)
    be2 = 0.1 * jax.random.normal(ks[9], (out_features,), jnp.float32)
    mu2 = jnp.zeros((out_features,), jnp.float32)
    var2 = jnp.ones((out_features,), jnp.float32)

    # Fold BN into scale/shift applied after (x @ W^T + b):
    #   bn(z) = (z - mu)*g/sqrt(var+eps) + beta = z*s + t  with
    #   s = g/sqrt(var+eps), t = beta + (b - mu)*s   (linear bias folds into t).
    s1 = g1 / jnp.sqrt(var1 + eps)
    t1 = be1 + (b1 - mu1) * s1
    s2 = g2 / jnp.sqrt(var2 + eps)
    t2 = be2 + (b2 - mu2) * s2

    return (w1.T, s1, t1, w2.T, s2, t2), (w1, b1, g1, be1, mu1, var1,
                                          w2, b2, g2, be2, mu2, var2)


def mlp_ref(x, raw, eps=1e-5):
    """Pure-JAX f32 reference mirroring the PyTorch forward (BN in eval mode)."""
    w1, b1, g1, be1, mu1, var1, w2, b2, g2, be2, mu2, var2 = raw
    T, B, N, C = x.shape
    h = x.reshape(T * B, N, C) @ w1.T + b1
    h = (h - mu1) / jnp.sqrt(var1 + eps) * g1 + be1
    h = jnp.maximum(h, 0.0)
    y = h @ w2.T + b2
    y = (y - mu2) / jnp.sqrt(var2 + eps) * g2 + be2
    y = jnp.maximum(y, 0.0)
    return y.reshape(T, B, N, -1)


if __name__ == "__main__":
    key = jax.random.PRNGKey(0)
    kx, kp = jax.random.split(key)

    T, B, N, C = 2, 2, 16, 32
    hidden = 64
    out_features = C  # out_features = out_features or in_features

    x = jax.random.normal(kx, (T, B, N, C), jnp.float32)
    params, raw = make_params(kp, C, hidden, out_features)

    out = mlp_pallas(x, params)
    out = jax.block_until_ready(out)

    ref = mlp_ref(x, raw)
    assert out.shape == (T, B, N, out_features)
    # bf16 matmul inputs + bf16 output store (f32 accumulation) ->
    # loosened tolerance vs the f32 reference.
    assert jnp.allclose(out.astype(jnp.float32), ref, atol=5e-2, rtol=5e-2), \
        "mismatch vs reference"

    # TODO(synk): nn.Dropout(drop=0.0) and BatchNorm1d training-mode running-stat
    # updates are omitted (identity / inference mode respectively).

    print("KERNEL_OK")
</pallas_src>

<mosaic_0001>
module attributes {stable_mosaic.version = 11 : i64} {
  func.func @mlp_kernel(%arg0: i32, %arg1: memref<32x128xbf16, #tpu.memory_space<vmem>>, %arg2: memref<128x128xbf16, #tpu.memory_space<vmem>>, %arg3: memref<2x128xf32, #tpu.memory_space<vmem>>, %arg4: memref<128x128xbf16, #tpu.memory_space<vmem>>, %arg5: memref<2x128xf32, #tpu.memory_space<vmem>>, %arg6: memref<32x128xbf16, #tpu.memory_space<vmem>>) attributes {dimension_semantics = [#tpu.dimension_semantics<parallel>], iteration_bounds = array<i64: 2>, scalar_prefetch = 0 : i64, scratch_operands = 0 : i64, tpu.core_type = #tpu.core_type<tc>, window_params = [{transform_indices = @transform_0, window_bounds = array<i64: 32, 128>}, {pipeline_mode = #tpu.pipeline_mode<synchronous>, transform_indices = @transform_1, window_bounds = array<i64: 128, 128>}, {pipeline_mode = #tpu.pipeline_mode<synchronous>, transform_indices = @transform_2, window_bounds = array<i64: 2, 128>}, {pipeline_mode = #tpu.pipeline_mode<synchronous>, transform_indices = @transform_3, window_bounds = array<i64: 128, 128>}, {pipeline_mode = #tpu.pipeline_mode<synchronous>, transform_indices = @transform_4, window_bounds = array<i64: 2, 128>}, {transform_indices = @transform_5, window_bounds = array<i64: 32, 128>}]} {
    %c0 = arith.constant 0 : index
    %c0_0 = arith.constant 0 : index
    %0 = vector.load %arg1[%c0, %c0_0] : memref<32x128xbf16, #tpu.memory_space<vmem>>, vector<32x128xbf16>
    %c0_1 = arith.constant 0 : index
    %c0_2 = arith.constant 0 : index
    %1 = vector.load %arg2[%c0_1, %c0_2] : memref<128x128xbf16, #tpu.memory_space<vmem>>, vector<128x128xbf16>
    %cst = arith.constant dense<0.000000e+00> : vector<32x128xf32>
    %2 = tpu.matmul %0, %1, %cst {dimension_numbers = #tpu.dot_dimension_numbers<[1], [0], [0], [1], [0, 0, 1, 1], [], []>} : vector<32x128xbf16>, vector<128x128xbf16>, vector<32x128xf32> -> vector<32x128xf32>
    %c0_3 = arith.constant 0 : index
    %c0_4 = arith.constant 0 : index
    %3 = vector.load %arg3[%c0_3, %c0_4] : memref<2x128xf32, #tpu.memory_space<vmem>>, vector<1x128xf32>
    %4 = vector.broadcast %3 : vector<1x128xf32> to vector<32x128xf32>
    %5 = arith.mulf %2, %4 : vector<32x128xf32>
    %c1 = arith.constant 1 : index
    %c0_5 = arith.constant 0 : index
    %6 = vector.load %arg3[%c1, %c0_5] : memref<2x128xf32, #tpu.memory_space<vmem>>, vector<1x128xf32>
    %7 = vector.broadcast %6 : vector<1x128xf32> to vector<32x128xf32>
    %8 = arith.addf %5, %7 : vector<32x128xf32>
    %cst_6 = arith.constant 0.000000e+00 : f32
    %9 = vector.broadcast %cst_6 : f32 to vector<32x128xf32>
    %10 = arith.maximumf %8, %9 : vector<32x128xf32>
    %11 = arith.truncf %10 : vector<32x128xf32> to vector<32x128xbf16>
    %c0_7 = arith.constant 0 : index
    %c0_8 = arith.constant 0 : index
    %12 = vector.load %arg4[%c0_7, %c0_8] : memref<128x128xbf16, #tpu.memory_space<vmem>>, vector<128x128xbf16>
    %cst_9 = arith.constant dense<0.000000e+00> : vector<32x128xf32>
    %13 = tpu.matmul %11, %12, %cst_9 {dimension_numbers = #tpu.dot_dimension_numbers<[1], [0], [0], [1], [0, 0, 1, 1], [], []>} : vector<32x128xbf16>, vector<128x128xbf16>, vector<32x128xf32> -> vector<32x128xf32>
    %c0_10 = arith.constant 0 : index
    %c0_11 = arith.constant 0 : index
    %14 = vector.load %arg5[%c0_10, %c0_11] : memref<2x128xf32, #tpu.memory_space<vmem>>, vector<1x128xf32>
    %15 = vector.broadcast %14 : vector<1x128xf32> to vector<32x128xf32>
    %16 = arith.mulf %13, %15 : vector<32x128xf32>
    %c1_12 = arith.constant 1 : index
    %c0_13 = arith.constant 0 : index
    %17 = vector.load %arg5[%c1_12, %c0_13] : memref<2x128xf32, #tpu.memory_space<vmem>>, vector<1x128xf32>
    %18 = vector.broadcast %17 : vector<1x128xf32> to vector<32x128xf32>
    %19 = arith.addf %16, %18 : vector<32x128xf32>
    %cst_14 = arith.constant 0.000000e+00 : f32
    %20 = vector.broadcast %cst_14 : f32 to vector<32x128xf32>
    %21 = arith.maximumf %19, %20 : vector<32x128xf32>
    %22 = arith.truncf %21 : vector<32x128xf32> to vector<32x128xbf16>
    %c0_15 = arith.constant 0 : index
    %c0_16 = arith.constant 0 : index
    %23 = vector.load %arg6[%c0_15, %c0_16] : memref<32x128xbf16, #tpu.memory_space<vmem>>, vector<32x128xbf16>
    tpu.vector_store %arg6[%c0_15, %c0_16], %22 {strides = array<i32>} : memref<32x128xbf16, #tpu.memory_space<vmem>>, vector<32x128xbf16>,
    return
  }
  func.func @transform_0(%arg0: i32) -> (i32, i32) {
    %c0_i32 = arith.constant 0 : i32
    %c0_i32_0 = arith.constant 0 : i32
    return %arg0, %c0_i32 : i32, i32
  }
  func.func @transform_1(%arg0: i32) -> (i32, i32) {
    %c0_i32 = arith.constant 0 : i32
    %c0_i32_0 = arith.constant 0 : i32
    %c0_i32_1 = arith.constant 0 : i32
    return %c0_i32, %c0_i32_0 : i32, i32
  }
  func.func @transform_2(%arg0: i32) -> (i32, i32) {
    %c0_i32 = arith.constant 0 : i32
    %c0_i32_0 = arith.constant 0 : i32
    %c0_i32_1 = arith.constant 0 : i32
    return %c0_i32, %c0_i32_0 : i32, i32
  }
  func.func @transform_3(%arg0: i32) -> (i32, i32) {
    %c0_i32 = arith.constant 0 : i32
    %c0_i32_0 = arith.constant 0 : i32
    %c0_i32_1 = arith.constant 0 : i32
    return %c0_i32, %c0_i32_0 : i32, i32
  }
  func.func @transform_4(%arg0: i32) -> (i32, i32) {
    %c0_i32 = arith.constant 0 : i32
    %c0_i32_0 = arith.constant 0 : i32
    %c0_i32_1 = arith.constant 0 : i32
    return %c0_i32, %c0_i32_0 : i32, i32
  }
  func.func @transform_5(%arg0: i32) -> (i32, i32) {
    %c0_i32 = arith.constant 0 : i32
    %c0_i32_0 = arith.constant 0 : i32
    return %arg0, %c0_i32 : i32, i32
  }
}

</mosaic_0001>

<llo_original>
// kernel: tpu_custom_call.1
$region0: #{tpu_custom_call.1}
  #allocation0 [shape = 'u32[]', space=smem, size = 0x4, offset = 0x4, fixed_abs, tag = 'smem constant byte address 0x4 - core index']
  #allocation1 [shape = 'u32[72,128]{1,0:T(1,128)}', space=vmem, size = 0x9000, scoped, tag = 'internal scratch']
  %s0 = inlined_call_operand.hbm [shape: bf16[64,128], index: 0, kind: input, shape index: {}]
  %s1 = inlined_call_operand.hbm [shape: bf16[128,128], index: 1, kind: input, shape index: {}]
  %s2 = inlined_call_operand.hbm [shape: f32[2,128], index: 2, kind: input, shape index: {}]
  %s3 = inlined_call_operand.hbm [shape: bf16[128,128], index: 3, kind: input, shape index: {}]
  %s4 = inlined_call_operand.vmem [shape: f32[2,128], index: 4, kind: input, shape index: {}]
  %s5 = inlined_call_operand.hbm [shape: bf16[64,128], index: 5, kind: output, shape index: {}]
  %s6 = sld [smem:[#allocation0]]
  $region69: #{tpu_custom_call.1} parent=0
    _
  %s8 = ssub.s32 1, %s6
  %s9 = scalar_select 0, %s8, %s6
  $region1: #{tpu_custom_call.1} parent=0
    #allocation2 [shape = 'u8[16384]{0}', space=vmem, size = 0x4000, scoped, tag = 'input window, operand 0']
    #allocation3 [shape = 's32[2]{0}', space=sflag, size = 0x8, scoped, tag = 'scoped memory for tpu_custom_call.1']
    #allocation4 [shape = 's32[2]{0}', space=sflag, size = 0x8, scoped, tag = 'scoped memory for tpu_custom_call.1']
    #allocation5 [shape = 'u8[32768]{0}', space=vmem, size = 0x8000, scoped, tag = 'input window, operand 1, single buffered']
    #allocation6 [shape = 's32[1]{0}', space=sflag, size = 0x4, scoped, tag = 'scoped memory for tpu_custom_call.1']
    #allocation7 [shape = 'u8[1024]{0}', space=vmem, size = 0x400, scoped, tag = 'input window, operand 2, single buffered']
    #allocation8 [shape = 'u8[32768]{0}', space=vmem, size = 0x8000, scoped, tag = 'input window, operand 3, single buffered']
    #allocation9 [shape = 's32[1]{0}', space=sflag, size = 0x4, scoped, tag = 'scoped memory for tpu_custom_call.1']
    #allocation10 [shape = 'u8[16384]{0}', space=vmem, size = 0x4000, scoped, tag = 'output window, operand 0']
    %10 = vsyncpa [#allocation3], 0
    %s11 = scalar_lea.sflag [#allocation3], 1
    %12 = vsyncpa %s11, 0
    %13 = vsyncpa [#allocation6], 0
    %14 = vsyncpa [#allocation9], 0
    %15 = vsyncpa [#allocation4], 0
    %s16 = scalar_lea.sflag [#allocation4], 1
    %17 = vsyncpa %s16, 0
    loop: start=0, step=1, limit=4
    $region2: #{tpu_custom_call.1} parent=1 // loop_pre_header
      _
    $region3: #{tpu_custom_call.1} parent=1 // loop_header
      %s19 = sphi 0, %s23
      %p20 = scmp.ge.s32.totalorder %s19, 4
      %s29 = sphi 0, %s31
      %s32 = sphi 0, %s29
      %s33 = sphi 0, %s32
      %s49 = sphi 0, %s33
      %s53 = sphi 0, %s53
      %s55 = sphi 0, %s53
      %s56 = sphi 0, %s55
      %s70 = sphi 0, %s56
      %s74 = sphi 0, %s74
      %s76 = sphi 0, %s74
      %s77 = sphi 0, %s76
      %s91 = sphi 0, %s77
      %s95 = sphi 0, %s95
      %s97 = sphi 0, %s95
      %s98 = sphi 0, %s97
      %s112 = sphi 0, %s98
      %s116 = sphi 0, %s116
      %s118 = sphi 0, %s116
      %s119 = sphi 0, %s118
      %s133 = sphi 0, %s119
      %s139 = sphi 0, %s141
      %s142 = sphi 0, %s139
      %s143 = sphi 0, %s142
      %s159 = sphi 0, %s143
    $region4: #{tpu_custom_call.1} parent=1 // loop_header_branch
      %22 = sbr.rel (%p20) target = $region8
    $region5: #{tpu_custom_call.1} parent=1 // loop_body
      %s24 = ssub.s32 %s19, 1
      %s25 = ssub.s32 %s19, 2
      %s26 = sadd.s32 %s19, 1
      %s27 = ssub.s32 %s19, %s26
      %p28 = scmp.eq.s32.totalorder %s27, 0
      %s30 = sadd.s32 %s29, 1
      %s31 = scalar_select %p28, %s29, %s30
      %p34 = pneg %p28
      %p35 = scmp.eq.s32.totalorder %s19, 1
      %p36 = por %p34, %p35
      %p37 = scmp.ne.s32.totalorder %s29, %s32
      %p38 = scmp.eq.s32.totalorder %s19, 0
      %p39 = por %p37, %p38
      %p40 = scmp.ne.s32.totalorder %s29, %s32
      %p41 = scmp.eq.s32.totalorder %s24, 1
      %p42 = por %p40, %p41
      %p43 = scmp.ne.s32.totalorder %s32, %s33
      %p44 = scmp.eq.s32.totalorder %s24, 0
      %p45 = por %p43, %p44
      %p46 = scmp.ne.s32.totalorder %s32, %s33
      %p47 = scmp.eq.s32.totalorder %s25, 1
      %p48 = por %p46, %p47
      %p50 = scmp.ne.s32.totalorder %s33, %s49
      %p51 = scmp.eq.s32.totalorder %s25, 0
      %p52 = por %p50, %p51
      %s54 = sadd.s32 %s53, 1
      %p57 = scmp.eq.s32.totalorder %s19, 1
      %p58 = scmp.ne.s32.totalorder %s53, %s55
      %p59 = scmp.eq.s32.totalorder %s19, 0
      %p60 = por %p58, %p59
      %p61 = scmp.ne.s32.totalorder %s53, %s55
      %p62 = scmp.eq.s32.totalorder %s24, 1
      %p63 = por %p61, %p62
      %p64 = scmp.ne.s32.totalorder %s55, %s56
      %p65 = scmp.eq.s32.totalorder %s24, 0
      %p66 = por %p64, %p65
      %p67 = scmp.ne.s32.totalorder %s55, %s56
      %p68 = scmp.eq.s32.totalorder %s25, 1
      %p69 = por %p67, %p68
      %p71 = scmp.ne.s32.totalorder %s56, %s70
      %p72 = scmp.eq.s32.totalorder %s25, 0
      %p73 = por %p71, %p72
      %s75 = sadd.s32 %s74, 1
      %p78 = scmp.eq.s32.totalorder %s19, 1
      %p79 = scmp.ne.s32.totalorder %s74, %s76
      %p80 = scmp.eq.s32.totalorder %s19, 0
      %p81 = por %p79, %p80
      %p82 = scmp.ne.s32.totalorder %s74, %s76
      %p83 = scmp.eq.s32.totalorder %s24, 1
      %p84 = por %p82, %p83
      %p85 = scmp.ne.s32.totalorder %s76, %s77
      %p86 = scmp.eq.s32.totalorder %s24, 0
      %p87 = por %p85, %p86
      %p88 = scmp.ne.s32.totalorder %s76, %s77
      %p89 = scmp.eq.s32.totalorder %s25, 1
      %p90 = por %p88, %p89
      %p92 = scmp.ne.s32.totalorder %s77, %s91
      %p93 = scmp.eq.s32.totalorder %s25, 0
      %p94 = por %p92, %p93
      %s96 = sadd.s32 %s95, 1
      %p99 = scmp.eq.s32.totalorder %s19, 1
      %p100 = scmp.ne.s32.totalorder %s95, %s97
      %p101 = scmp.eq.s32.totalorder %s19, 0
      %p102 = por %p100, %p101
      %p103 = scmp.ne.s32.totalorder %s95, %s97
      %p104 = scmp.eq.s32.totalorder %s24, 1
      %p105 = por %p103, %p104
      %p106 = scmp.ne.s32.totalorder %s97, %s98
      %p107 = scmp.eq.s32.totalorder %s24, 0
      %p108 = por %p106, %p107
      %p109 = scmp.ne.s32.totalorder %s97, %s98
      %p110 = scmp.eq.s32.totalorder %s25, 1
      %p111 = por %p109, %p110
      %p113 = scmp.ne.s32.totalorder %s98, %s112
      %p114 = scmp.eq.s32.totalorder %s25, 0
      %p115 = por %p113, %p114
      %s117 = sadd.s32 %s116, 1
      %p120 = scmp.eq.s32.totalorder %s19, 1
      %p121 = scmp.ne.s32.totalorder %s116, %s118
      %p122 = scmp.eq.s32.totalorder %s19, 0
      %p123 = por %p121, %p122
      %p124 = scmp.ne.s32.totalorder %s116, %s118
      %p125 = scmp.eq.s32.totalorder %s24, 1
      %p126 = por %p124, %p125
      %p127 = scmp.ne.s32.totalorder %s118, %s119
      %p128 = scmp.eq.s32.totalorder %s24, 0
      %p129 = por %p127, %p128
      %p130 = scmp.ne.s32.totalorder %s118, %s119
      %p131 = scmp.eq.s32.totalorder %s25, 1
      %p132 = por %p130, %p131
      %p134 = scmp.ne.s32.totalorder %s119, %s133
      %p135 = scmp.eq.s32.totalorder %s25, 0
      %p136 = por %p134, %p135
      %s137 = ssub.s32 %s19, %s26
      %p138 = scmp.eq.s32.totalorder %s137, 0
      %s140 = sadd.s32 %s139, 1
      %s141 = scalar_select %p138, %s139, %s140
      %p144 = pneg %p138
      %p145 = scmp.eq.s32.totalorder %s19, 1
      %p146 = por %p144, %p145
      %p147 = scmp.ne.s32.totalorder %s139, %s142
      %p148 = scmp.eq.s32.totalorder %s19, 0
      %p149 = por %p147, %p148
      %p150 = scmp.ne.s32.totalorder %s139, %s142
      %p151 = scmp.eq.s32.totalorder %s24, 1
      %p152 = por %p150, %p151
      %p153 = scmp.ne.s32.totalorder %s142, %s143
      %p154 = scmp.eq.s32.totalorder %s24, 0
      %p155 = por %p153, %p154
      %p156 = scmp.ne.s32.totalorder %s142, %s143
      %p157 = scmp.eq.s32.totalorder %s25, 1
      %p158 = por %p156, %p157
      %p160 = scmp.ne.s32.totalorder %s143, %s159
      %p161 = scmp.eq.s32.totalorder %s25, 0
      %p162 = por %p160, %p161
      %p163 = scmp.le.s32.totalorder 1, %s19
      %p164 = scmp.lt.s32.totalorder %s19, 3
      %p165 = pnand %p163, %p164
      %p166 = pneg %p165
      // Predicated region
      $region9: #{tpu_custom_call.1} parent=5 // pred_check
        _
      $region10: #{tpu_custom_call.1} parent=5 // pred_check_branch
        %168 = sbr.rel (%p165) target = $region12
      $region11: #{tpu_custom_call.1} parent=5 // pred_region
        %s169 = ssub.s32 %s19, 1
        // Predicated region
        $region13: #{tpu_custom_call.1} parent=11 // pred_check
          %p170 = pneg %p66
        $region14: #{tpu_custom_call.1} parent=11 // pred_check_branch
          %172 = sbr.rel (%p170) target = $region16
        $region15: #{tpu_custom_call.1} parent=11 // pred_region
          %174 = vsyncadd [#allocation6], 0
          %s175 = sshll.u32 %s1, 4
          %s176 = int_to_ptr.hbm [resolvable:$true] %s175
          %s177 = sshll.u32 [#allocation5], 4
          %s178 = int_to_ptr.vmem [resolvable:$true] %s177
          %183 = dma.hbm_to_vmem [thread:$0]  %s176, 1024, %s178, [#allocation6], 64, 64, 4
        $region16: #{tpu_custom_call.1} parent=11 // pred_fallthru
          _
        // Predicated region
        $region17: #{tpu_custom_call.1} parent=11 // pred_check
          %p184 = pneg %p87
        $region18: #{tpu_custom_call.1} parent=11 // pred_check_branch
          %186 = sbr.rel (%p184) target = $region20
        $region19: #{tpu_custom_call.1} parent=11 // pred_region
          %188 = vsyncadd [#allocation6], 0
          %s190 = sshll.u32 %s2, 4
          %s191 = int_to_ptr.hbm [resolvable:$true] %s190
          %s192 = sshll.u32 [#allocation7], 4
          %s193 = int_to_ptr.vmem [resolvable:$true] %s192
          %195 = dma.hbm_to_vmem [thread:$0]  %s191, 32, %s193, [#allocation6]
        $region20: #{tpu_custom_call.1} parent=11 // pred_fallthru
          _
        // Predicated region
        $region21: #{tpu_custom_call.1} parent=11 // pred_check
          %p196 = pneg %p108
        $region22: #{tpu_custom_call.1} parent=11 // pred_check_branch
          %198 = sbr.rel (%p196) target = $region24
        $region23: #{tpu_custom_call.1} parent=11 // pred_region
          %200 = vsyncadd [#allocation9], 0
          %s201 = sshll.u32 %s3, 4
          %s202 = int_to_ptr.hbm [resolvable:$true] %s201
          %s203 = sshll.u32 [#allocation8], 4
          %s204 = int_to_ptr.vmem [resolvable:$true] %s203
          %209 = dma.hbm_to_vmem [thread:$0]  %s202, 1024, %s204, [#allocation9], 64, 64, 4
        $region24: #{tpu_custom_call.1} parent=11 // pred_fallthru
          _
        // Predicated region
        $region25: #{tpu_custom_call.1} parent=11 // pred_check
          %p210 = pneg %p129
        $region26: #{tpu_custom_call.1} parent=11 // pred_check_branch
          %212 = sbr.rel (%p210) target = $region28
        $region27: #{tpu_custom_call.1} parent=11 // pred_region
          _
        $region28: #{tpu_custom_call.1} parent=11 // pred_fallthru
          _
      $region12: #{tpu_custom_call.1} parent=5 // pred_fallthru
        _
      %p213 = scmp.lt.s32.totalorder %s19, 2
      // Predicated region
      $region29: #{tpu_custom_call.1} parent=5 // pred_check
        %p214 = pneg %p213
      $region30: #{tpu_custom_call.1} parent=5 // pred_check_branch
        %216 = sbr.rel (%p214) target = $region32
      $region31: #{tpu_custom_call.1} parent=5 // pred_region
        // Predicated region
        $region33: #{tpu_custom_call.1} parent=31 // pred_check
          %p217 = pneg %p39
        $region34: #{tpu_custom_call.1} parent=31 // pred_check_branch
          %219 = sbr.rel (%p217) target = $region36
        $region35: #{tpu_custom_call.1} parent=31 // pred_region
          %s220 = sand.u32 %s29, 1
          %s221 = scalar_lea.sflag [#allocation3], %s220
          %s222 = sand.u32 %s29, 1
          %s223 = smul.addr %s222, 16
          %s224 = scalar_lea.vmem [#allocation2], %s223
          %s225 = smul.u32 4, %s19
          %227 = vsyncadd %s221, 0
          %s228 = smul.addr %s225, 4
          %s229 = scalar_lea.hbm %s0, %s228
          %s230 = sshll.u32 %s229, 4
          %s231 = int_to_ptr.hbm [resolvable:$true] %s230
          %s232 = sshll.u32 %s224, 4
          %s233 = int_to_ptr.vmem [resolvable:$true] %s232
          %238 = dma.hbm_to_vmem [thread:$0]  %s231, 256, %s233, %s221, 64, 64, 4
        $region36: #{tpu_custom_call.1} parent=31 // pred_fallthru
          _
      $region32: #{tpu_custom_call.1} parent=5 // pred_fallthru
        _
      %p239 = scmp.le.s32.totalorder 1, %s19
      %p240 = scmp.lt.s32.totalorder %s19, 3
      %p241 = pnand %p239, %p240
      %p242 = pneg %p241
      // Predicated region
      $region37: #{tpu_custom_call.1} parent=5 // pred_check
        _
      $region38: #{tpu_custom_call.1} parent=5 // pred_check_branch
        %244 = sbr.rel (%p241) target = $region40
      $region39: #{tpu_custom_call.1} parent=5 // pred_region
        %s245 = ssub.s32 %s19, 1
        %s246 = sand.u32 %s32, 1
        %s247 = scalar_lea.sflag [#allocation3], %s246
        %s248 = sand.u32 %s32, 1
        %s249 = smul.addr %s248, 16
        %s250 = scalar_lea.vmem [#allocation2], %s249
        // Predicated region
        $region41: #{tpu_custom_call.1} parent=39 // pred_check
          %p251 = pneg %p45
        $region42: #{tpu_custom_call.1} parent=39 // pred_check_branch
          %253 = sbr.rel (%p251) target = $region44
        $region43: #{tpu_custom_call.1} parent=39 // pred_region
          %255 = dma.done %s247, 256
        $region44: #{tpu_custom_call.1} parent=39 // pred_fallthru
          _
        // Predicated region
        $region45: #{tpu_custom_call.1} parent=39 // pred_check
          %p256 = pneg %p66
        $region46: #{tpu_custom_call.1} parent=39 // pred_check_branch
          %258 = sbr.rel (%p256) target = $region48
        $region47: #{tpu_custom_call.1} parent=39 // pred_region
          %260 = dma.done [#allocation6], 1024
        $region48: #{tpu_custom_call.1} parent=39 // pred_fallthru
          _
        // Predicated region
        $region49: #{tpu_custom_call.1} parent=39 // pred_check
          %p261 = pneg %p87
        $region50: #{tpu_custom_call.1} parent=39 // pred_check_branch
          %263 = sbr.rel (%p261) target = $region52
        $region51: #{tpu_custom_call.1} parent=39 // pred_region
          %265 = dma.done [#allocation6], 32
        $region52: #{tpu_custom_call.1} parent=39 // pred_fallthru
          _
        // Predicated region
        $region53: #{tpu_custom_call.1} parent=39 // pred_check
          %p266 = pneg %p108
        $region54: #{tpu_custom_call.1} parent=39 // pred_check_branch
          %268 = sbr.rel (%p266) target = $region56
        $region55: #{tpu_custom_call.1} parent=39 // pred_region
          %270 = dma.done [#allocation9], 1024
        $region56: #{tpu_custom_call.1} parent=39 // pred_fallthru
          _
        %s271 = sand.u32 %s32, 1
        %s272 = scalar_lea.sflag [#allocation3], %s271
        %s273 = sand.u32 %s32, 1
        %s274 = smul.addr %s273, 16
        %s275 = scalar_lea.vmem [#allocation2], %s274
        %p276 = pneg %p45
        %p277 = pneg %p42
        %p278 = pneg %p66
        %p279 = pneg %p63
        %p280 = pneg %p87
        %p281 = pneg %p84
        %p282 = pneg %p108
        %p283 = pneg %p105
        %p284 = pneg %p129
        %p285 = pneg %p126
        %p286 = pneg %p155
        %p287 = pneg %p152
        %s288 = sand.u32 %s142, 1
        %s289 = scalar_lea.sflag [#allocation4], %s288
        %s290 = sand.u32 %s142, 1
        %s291 = smul.addr %s290, 16
        %s292 = scalar_lea.vmem [#allocation10], %s291
        %s293 = smul.u32 4, %s24
        %s294 = smul.u32 4, %s24
        %v295 = vld [vmem:[%s250] sm:$0xf]
        %v296 = vld [vmem:[%s250 + $0x4] sm:$0xf]
        %v297 = vld [vmem:[%s250 + $0x8] sm:$0xf]
        %v298 = vld [vmem:[%s250 + $0xc] sm:$0xf]
        %v299 = vld [vmem:[#allocation5] sm:$0xf]
        %v300 = vld [vmem:[#allocation5 + $0x4] sm:$0xf]
        %v301 = vld [vmem:[#allocation5 + $0x8] sm:$0xf]
        %v302 = vld [vmem:[#allocation5 + $0xc] sm:$0xf]
        %v303 = vld [vmem:[#allocation5 + $0x10] sm:$0xf]
        %v304 = vld [vmem:[#allocation5 + $0x14] sm:$0xf]
        %v305 = vld [vmem:[#allocation5 + $0x18] sm:$0xf]
        %v306 = vld [vmem:[#allocation5 + $0x1c] sm:$0xf]
        %v307 = vld [vmem:[#allocation5 + $0x20] sm:$0xf]
        %v308 = vld [vmem:[#allocation5 + $0x24] sm:$0xf]
        %v309 = vld [vmem:[#allocation5 + $0x28] sm:$0xf]
        %v310 = vld [vmem:[#allocation5 + $0x2c] sm:$0xf]
        %v311 = vld [vmem:[#allocation5 + $0x30] sm:$0xf]
        %v312 = vld [vmem:[#allocation5 + $0x34] sm:$0xf]
        %v313 = vld [vmem:[#allocation5 + $0x38] sm:$0xf]
        %v314 = vld [vmem:[#allocation5 + $0x3c] sm:$0xf]
        %v319 = vunpack.c.l.b16 %v295
        %v320 = vunpack.c.l.b16 %v296
        %v321 = vunpack.c.l.b16 %v297
        %v322 = vunpack.c.l.b16 %v298
        %v323 = vpack.c.b16 %v320, %v319
        %v324 = vpack.c.b16 %v322, %v321
        %v343 = vunpack.c.l.b16 %v299
        %v344 = vunpack.c.l.b16 %v300
        %v345 = vunpack.c.l.b16 %v301
        %v346 = vunpack.c.l.b16 %v302
        %v347 = vunpack.c.l.b16 %v303
        %v348 = vunpack.c.l.b16 %v304
        %v349 = vunpack.c.l.b16 %v305
        %v350 = vunpack.c.l.b16 %v306
        %v351 = vunpack.c.l.b16 %v307
        %v352 = vunpack.c.l.b16 %v308
        %v353 = vunpack.c.l.b16 %v309
        %v354 = vunpack.c.l.b16 %v310
        %v355 = vunpack.c.l.b16 %v311
        %v356 = vunpack.c.l.b16 %v312
        %v357 = vunpack.c.l.b16 %v313
        %v358 = vunpack.c.l.b16 %v314
        %v359 = vpack.c.b16 %v344, %v343
        %v360 = vpack.c.b16 %v346, %v345
        %v361 = vpack.c.b16 %v348, %v347
        %v362 = vpack.c.b16 %v350, %v349
        %v363 = vpack.c.b16 %v352, %v351
        %v364 = vpack.c.b16 %v354, %v353
        %v365 = vpack.c.b16 %v356, %v355
        %v366 = vpack.c.b16 %v358, %v357
        %375 = vmatpush.bf16.msra.mxu0 %v366
        %376 = vmatpush.bf16.msra.mxu0 %v365
        %377 = vmatpush.bf16.msra.mxu0 %v364
        %378 = vmatpush.bf16.msra.mxu0 %v363
        %379 = vmatpush.bf16.msra.mxu0 %v362
        %380 = vmatpush.bf16.msra.mxu0 %v361
        %381 = vmatpush.bf16.msra.mxu0 %v360
        %382 = vmatpush.bf16.msra.mxu0 %v359
        %383 = vmatmul.bf16.gmra.mxu0 %v323
        %v384 = vpop.f32.mrf.mxu0
        %v385 = vadd.f32 0.0, %v384
        %v386 = vpop.f32.mrf.mxu0
        %v387 = vadd.f32 0.0, %v386
        %388 = vmatmul.bf16.gmra.mxu0 %v324
        %v389 = vpop.f32.mrf.mxu0
        %v390 = vadd.f32 0.0, %v389
        %v391 = vpop.f32.mrf.mxu0
        %v392 = vadd.f32 0.0, %v391
        %393 = vdwg.mxu0
        %v394 = vld [vmem:[#allocation7] sm:$0x1]
        %v395 = vperm.slane %v394, 0
        %v396 = vmul.f32 %v385, %v395
        %v397 = vmul.f32 %v387, %v395
        %v398 = vmul.f32 %v390, %v395
        %v399 = vmul.f32 %v392, %v395
        %v400 = vld [vmem:[#allocation7 + $0x1] sm:$0x1]
        %v401 = vperm.slane %v400, 0
        %v402 = vadd.f32 %v396, %v401
        %v403 = vadd.f32 %v397, %v401
        %v404 = vadd.f32 %v398, %v401
        %v405 = vadd.f32 %v399, %v401
        %v406 = vmax.f32 %v402, 0.0
        %v407 = vmax.f32 %v403, 0.0
        %v408 = vmax.f32 %v404, 0.0
        %v409 = vmax.f32 %v405, 0.0
        %v410 = vpack.c.bf16 %v407, %v406
        %v411 = vpack.c.bf16 %v409, %v408
        %v412 = vld [vmem:[#allocation8] sm:$0xf]
        %v413 = vld [vmem:[#allocation8 + $0x4] sm:$0xf]
        %v414 = vld [vmem:[#allocation8 + $0x8] sm:$0xf]
        %v415 = vld [vmem:[#allocation8 + $0xc] sm:$0xf]
        %v416 = vld [vmem:[#allocation8 + $0x10] sm:$0xf]
        %v417 = vld [vmem:[#allocation8 + $0x14] sm:$0xf]
        %v418 = vld [vmem:[#allocation8 + $0x18] sm:$0xf]
        %v419 = vld [vmem:[#allocation8 + $0x1c] sm:$0xf]
        %v420 = vld [vmem:[#allocation8 + $0x20] sm:$0xf]
        %v421 = vld [vmem:[#allocation8 + $0x24] sm:$0xf]
        %v422 = vld [vmem:[#allocation8 + $0x28] sm:$0xf]
        %v423 = vld [vmem:[#allocation8 + $0x2c] sm:$0xf]
        %v424 = vld [vmem:[#allocation8 + $0x30] sm:$0xf]
        %v425 = vld [vmem:[#allocation8 + $0x34] sm:$0xf]
        %v426 = vld [vmem:[#allocation8 + $0x38] sm:$0xf]
        %v427 = vld [vmem:[#allocation8 + $0x3c] sm:$0xf]
        %v444 = vunpack.c.l.b16 %v412
        %v445 = vunpack.c.l.b16 %v413
        %v446 = vunpack.c.l.b16 %v414
        %v447 = vunpack.c.l.b16 %v415
        %v448 = vunpack.c.l.b16 %v416
        %v449 = vunpack.c.l.b16 %v417
        %v450 = vunpack.c.l.b16 %v418
        %v451 = vunpack.c.l.b16 %v419
        %v452 = vunpack.c.l.b16 %v420
        %v453 = vunpack.c.l.b16 %v421
        %v454 = vunpack.c.l.b16 %v422
        %v455 = vunpack.c.l.b16 %v423
        %v456 = vunpack.c.l.b16 %v424
        %v457 = vunpack.c.l.b16 %v425
        %v458 = vunpack.c.l.b16 %v426
        %v459 = vunpack.c.l.b16 %v427
        %v460 = vpack.c.b16 %v445, %v444
        %v461 = vpack.c.b16 %v447, %v446
        %v462 = vpack.c.b16 %v449, %v448
        %v463 = vpack.c.b16 %v451, %v450
        %v464 = vpack.c.b16 %v453, %v452
        %v465 = vpack.c.b16 %v455, %v454
        %v466 = vpack.c.b16 %v457, %v456
        %v467 = vpack.c.b16 %v459, %v458
        %476 = vmatpush.bf16.msra.mxu0 %v467
        %477 = vmatpush.bf16.msra.mxu0 %v466
        %478 = vmatpush.bf16.msra.mxu0 %v465
        %479 = vmatpush.bf16.msra.mxu0 %v464
        %480 = vmatpush.bf16.msra.mxu0 %v463
        %481 = vmatpush.bf16.msra.mxu0 %v462
        %482 = vmatpush.bf16.msra.mxu0 %v461
        %483 = vmatpush.bf16.msra.mxu0 %v460
        %484 = vmatmul.bf16.gmra.mxu0 %v410
        %v485 = vpop.f32.mrf.mxu0
        %v486 = vadd.f32 0.0, %v485
        %v487 = vpop.f32.mrf.mxu0
        %v488 = vadd.f32 0.0, %v487
        %489 = vmatmul.bf16.gmra.mxu0 %v411
        %v490 = vpop.f32.mrf.mxu0
        %v491 = vadd.f32 0.0, %v490
        %v492 = vpop.f32.mrf.mxu0
        %v493 = vadd.f32 0.0, %v492
        %494 = vdwg.mxu0
        %v495 = vld [vmem:[%s4] sm:$0x1]
        %v496 = vperm.slane %v495, 0
        %v497 = vmul.f32 %v486, %v496
        %v498 = vmul.f32 %v488, %v496
        %v499 = vmul.f32 %v491, %v496
        %v500 = vmul.f32 %v493, %v496
        %v501 = vld [vmem:[%s4 + $0x1] sm:$0x1]
        %v502 = vperm.slane %v501, 0
        %v503 = vadd.f32 %v497, %v502
        %v504 = vadd.f32 %v498, %v502
        %v505 = vadd.f32 %v499, %v502
        %v506 = vadd.f32 %v500, %v502
        %v507 = vmax.f32 %v503, 0.0
        %v508 = vmax.f32 %v504, 0.0
        %v509 = vmax.f32 %v505, 0.0
        %v510 = vmax.f32 %v506, 0.0
        %v511 = vpack.c.bf16 %v507, %v507
        %v512 = vpack.c.bf16 %v508, %v508
        %v513 = vpack.c.bf16 %v509, %v509
        %v514 = vpack.c.bf16 %v510, %v510
        %515 = vst [vmem:[%s292] sm:$0xf] %v511
        %516 = vst [vmem:[%s292 + $0x4] sm:$0xf] %v512
        %517 = vst [vmem:[%s292 + $0x8] sm:$0xf] %v513
        %518 = vst [vmem:[%s292 + $0xc] sm:$0xf] %v514
        %s519 = sand.u32 %s142, 1
        %s520 = scalar_lea.sflag [#allocation4], %s519
        %s521 = sand.u32 %s142, 1
        %s522 = smul.addr %s521, 16
        %s523 = scalar_lea.vmem [#allocation10], %s522
        // Predicated region
        $region57: #{tpu_custom_call.1} parent=39 // pred_check
          %p524 = pneg %p152
        $region58: #{tpu_custom_call.1} parent=39 // pred_check_branch
          %526 = sbr.rel (%p524) target = $region60
        $region59: #{tpu_custom_call.1} parent=39 // pred_region
          %s527 = smul.u32 4, %s24
          %529 = vsyncadd %s520, 0
          %s530 = smul.addr %s527, 4
          %s531 = scalar_lea.hbm %s5, %s530
          %s532 = sshll.u32 %s523, 4
          %s533 = int_to_ptr.vmem [resolvable:$true] %s532
          %s534 = sshll.u32 %s531, 4
          %s535 = int_to_ptr.hbm [resolvable:$true] %s534
          %540 = dma.vmem_to_hbm [thread:$0]  %s533, 256, %s535, %s520, 64, 64, 4
        $region60: #{tpu_custom_call.1} parent=39 // pred_fallthru
          _
      $region40: #{tpu_custom_call.1} parent=5 // pred_fallthru
        _
      %p541 = scmp.le.s32.totalorder 2, %s19
      // Predicated region
      $region61: #{tpu_custom_call.1} parent=5 // pred_check
        %p542 = pneg %p541
      $region62: #{tpu_custom_call.1} parent=5 // pred_check_branch
        %544 = sbr.rel (%p542) target = $region64
      $region63: #{tpu_custom_call.1} parent=5 // pred_region
        %s545 = ssub.s32 %s19, 2
        // Predicated region
        $region65: #{tpu_custom_call.1} parent=63 // pred_check
          %p546 = pneg %p158
        $region66: #{tpu_custom_call.1} parent=63 // pred_check_branch
          %548 = sbr.rel (%p546) target = $region68
        $region67: #{tpu_custom_call.1} parent=63 // pred_region
          %s549 = sand.u32 %s143, 1
          %s550 = scalar_lea.sflag [#allocation4], %s549
          %s551 = sand.u32 %s143, 1
          %s552 = smul.addr %s551, 16
          %s553 = scalar_lea.vmem [#allocation10], %s552
          %555 = dma.done %s550, 256
        $region68: #{tpu_custom_call.1} parent=63 // pred_fallthru
          _
      $region64: #{tpu_custom_call.1} parent=5 // pred_fallthru
        _
    $region6: #{tpu_custom_call.1} parent=1 // loop_footer
      %s23 = sadd.s32 1, %s19
    $region7: #{tpu_custom_call.1} parent=1 // loop_footer_branch
      %18 = sbr.rel target = $region3
    $region8: #{tpu_custom_call.1} parent=1 // loop_exit
      _
    %556 = vsyncpa [#allocation3], 1
    %s557 = scalar_lea.sflag [#allocation3], 1
    %558 = vsyncpa %s557, 1
    %559 = vsyncpa [#allocation6], 1
    %560 = vsyncpa [#allocation9], 1
    %561 = vsyncpa [#allocation4], 1
    %s562 = scalar_lea.sflag [#allocation4], 1
    %563 = vsyncpa %s562, 1

</llo_original>
